<compile_context>
chip_gen: v6e
topology: v6e:2x2x1
jax: 0.10.0
libtpu: 0.0.40
codegen_flags: <defaults>
</compile_context>

<pallas_src>
import functools

import jax
import jax.numpy as jnp
from jax.experimental import pallas as pl
from jax.experimental.pallas import tpu as pltpu

BN_EPS = 1e-5


def _conv11_kernel(x_ref, p_ref, o_ref, bord_ref, *, Cin, Cout, inv_m):
    # x_ref:    (Cin, N*H*W)     input, batch*spatial on lanes (lane-dense)
    # p_ref:    (Cout, Cin + 3)  packed [conv W | bias | gamma | beta]
    # o_ref:    (Cout, N*H*W)    ReLU(BN(conv(x))) on interior positions
    # bord_ref: (Cout, 1)        ReLU(BN(bias)) constant for padded border
    x = x_ref[...]                                   # (Cin, NHW) f32
    p = p_ref[...]                                   # (Cout, Cin + 3) f32
    w = p[:, :Cin]                                   # (Cout, Cin)
    g_col = p[:, Cin + 1:Cin + 2]                    # (Cout, 1) BN gamma
    be_col = p[:, Cin + 2:Cin + 3]                   # (Cout, 1) BN beta
    # Note: the conv bias column p[:, Cin:Cin+1] cancels exactly under
    # training-mode BN and is intentionally not used.

    # ---- 1x1 conv WITHOUT bias, as Cin broadcast FMAs on the VPU:
    #      z[co, l] = sum_ci w[co, ci] * x[ci, l]
    z = w[:, 0:1] * x[0:1, :]                        # (Cout, NHW)
    for ci in range(1, Cin):
        z = z + w[:, ci:ci + 1] * x[ci:ci + 1, :]

    # ---- BatchNorm2d (training mode) statistics over all N*(H+2)*(W+2)
    #      positions per channel.  Border positions have z == 0 exactly (the
    #      padding is zero and the bias is excluded), so only the interior
    #      contributes to the sums; the denominator uses the full count.
    s1 = jnp.sum(z, axis=1, keepdims=True)           # (Cout, 1)
    s2 = jnp.sum(z * z, axis=1, keepdims=True)       # (Cout, 1)
    mean_z = s1 * inv_m
    var = jnp.maximum(s2 * inv_m - mean_z * mean_z, 0.0)   # biased variance
    scale = g_col * jax.lax.rsqrt(var + BN_EPS)      # (Cout, 1)
    shift = be_col - mean_z * scale                  # == beta + (b - mean_y)*scale

    # ---- Fused normalize + ReLU.  Interior store is fully lane-dense
    #      (NHW = multiple of 128); the border is a per-channel constant.
    o_ref[...] = jnp.maximum(z * scale + shift, 0.0)
    bord_ref[...] = jnp.maximum(shift, 0.0)


def conv11_forward(x_nchw, w_oc_ic, bias, gamma, beta):
    """x_nchw: (N, Cin, H, W) float32. Returns (N, Cout, H+2, W+2) float32 (NCHW)."""
    N, Cin, H, W = x_nchw.shape
    Cout = w_oc_ic.shape[0]
    Hp, Wp = H + 2, W + 2
    NHW = N * H * W

    # Layout plumbing only (tiny tensors): channels -> sublanes, batch*spatial
    # -> lanes so every vreg touched by the kernel is fully dense.
    x_cl = jnp.transpose(x_nchw, (1, 0, 2, 3)).reshape(Cin, NHW)
    params = jnp.concatenate(
        [w_oc_ic,
         bias.reshape(Cout, 1),
         gamma.reshape(Cout, 1),
         beta.reshape(Cout, 1)],
        axis=1).astype(jnp.float32)                  # (Cout, Cin + 3)

    kernel = functools.partial(_conv11_kernel, Cin=Cin, Cout=Cout,
                               inv_m=1.0 / float(N * Hp * Wp))

    y_int, border = pl.pallas_call(
        kernel,
        out_shape=(jax.ShapeDtypeStruct((Cout, NHW), jnp.float32),
                   jax.ShapeDtypeStruct((Cout, 1), jnp.float32)),
        grid=(1,),
        in_specs=[
            pl.BlockSpec((Cin, NHW), lambda i: (0, 0)),
            pl.BlockSpec((Cout, Cin + 3), lambda i: (0, 0)),
        ],
        out_specs=(
            pl.BlockSpec((Cout, NHW), lambda i: (0, 0)),
            pl.BlockSpec((Cout, 1), lambda i: (0, 0)),
        ),
        compiler_params=pltpu.CompilerParams(
            dimension_semantics=("arbitrary",)),
    )(x_cl, params)

    # Assemble the padded NCHW output in the wrapper (free at these sizes):
    # per-channel constant canvas, interior pasted at offset (1, 1).
    y_nchw = jnp.transpose(y_int.reshape(Cout, N, H, W), (1, 0, 2, 3))
    canvas = jnp.broadcast_to(border.reshape(1, Cout, 1, 1), (N, Cout, Hp, Wp))
    return jax.lax.dynamic_update_slice(canvas, y_nchw, (0, 0, 1, 1))


def conv11_reference(x_nchw, w_oc_ic, bias, gamma, beta):
    """Pure-JAX reference with identical semantics (sanity check)."""
    x_nhwc = jnp.transpose(x_nchw, (0, 2, 3, 1))
    x_pad = jnp.pad(x_nhwc, ((0, 0), (1, 1), (1, 1), (0, 0)))
    y = jnp.einsum("nhwc,oc->nhwo", x_pad, w_oc_ic) + bias
    mean = jnp.mean(y, axis=(0, 1, 2), keepdims=True)
    var = jnp.mean((y - mean) ** 2, axis=(0, 1, 2), keepdims=True)
    y = (y - mean) * jax.lax.rsqrt(var + BN_EPS) * gamma + beta
    y = jnp.maximum(y, 0.0)
    return jnp.transpose(y, (0, 3, 1, 2))


if __name__ == "__main__":
    # Small shapes consistent with the module.
    N, Cin, Cout, H, W = 2, 4, 8, 16, 16

    key = jax.random.PRNGKey(0)
    kx, kw, kb = jax.random.split(key, 3)

    x = jax.random.normal(kx, (N, Cin, H, W), dtype=jnp.float32)

    # Conv2d parameter init (kaiming-uniform style bound = 1/sqrt(fan_in)).
    # Weight is logically (Cout, Cin, 1, 1) -> stored as (Cout, Cin).
    bound = 1.0 / (Cin ** 0.5)
    w = jax.random.uniform(kw, (Cout, Cin), jnp.float32, -bound, bound)
    b = jax.random.uniform(kb, (Cout,), jnp.float32, -bound, bound)

    # BatchNorm2d defaults: weight=1, bias=0 (training mode -> batch stats).
    gamma = jnp.ones((Cout,), jnp.float32)
    beta = jnp.zeros((Cout,), jnp.float32)

    out = conv11_forward(x, w, b, gamma, beta)
    out = jax.block_until_ready(out)

    ref = conv11_reference(x, w, b, gamma, beta)
    assert out.shape == (N, Cout, H + 2, W + 2), out.shape
    assert jnp.allclose(out, ref, atol=5e-4, rtol=5e-4), "mismatch vs reference"

    print("KERNEL_OK")
</pallas_src>

<mosaic_0001>
module attributes {stable_mosaic.version = 11 : i64} {
  func.func @_conv11_kernel(%arg0: i32, %arg1: memref<4x512xf32, #tpu.memory_space<vmem>>, %arg2: memref<8x7xf32, #tpu.memory_space<vmem>>, %arg3: memref<8x512xf32, #tpu.memory_space<vmem>>, %arg4: memref<8x1xf32, #tpu.memory_space<vmem>>) attributes {dimension_semantics = [#tpu.dimension_semantics<arbitrary>], iteration_bounds = array<i64: 1>, scalar_prefetch = 0 : i64, scratch_operands = 0 : i64, tpu.core_type = #tpu.core_type<tc>, window_params = [{pipeline_mode = #tpu.pipeline_mode<synchronous>, transform_indices = @transform_0, window_bounds = array<i64: 4, 512>}, {pipeline_mode = #tpu.pipeline_mode<synchronous>, transform_indices = @transform_1, window_bounds = array<i64: 8, 7>}, {pipeline_mode = #tpu.pipeline_mode<synchronous>, transform_indices = @transform_2, window_bounds = array<i64: 8, 512>}, {pipeline_mode = #tpu.pipeline_mode<synchronous>, transform_indices = @transform_3, window_bounds = array<i64: 8, 1>}]} {
    %c0 = arith.constant 0 : index
    %c0_0 = arith.constant 0 : index
    %0 = vector.load %arg1[%c0, %c0_0] : memref<4x512xf32, #tpu.memory_space<vmem>>, vector<4x512xf32>
    %c0_1 = arith.constant 0 : index
    %c0_2 = arith.constant 0 : index
    %1 = vector.load %arg2[%c0_1, %c0_2] : memref<8x7xf32, #tpu.memory_space<vmem>>, vector<8x7xf32>
    %2 = vector.extract_strided_slice %1 {offsets = [0, 0], sizes = [8, 4], strides = [1, 1]} : vector<8x7xf32> to vector<8x4xf32>
    %3 = vector.extract_strided_slice %1 {offsets = [0, 5], sizes = [8, 1], strides = [1, 1]} : vector<8x7xf32> to vector<8x1xf32>
    %4 = vector.extract_strided_slice %1 {offsets = [0, 6], sizes = [8, 1], strides = [1, 1]} : vector<8x7xf32> to vector<8x1xf32>
    %5 = vector.extract_strided_slice %2 {offsets = [0, 0], sizes = [8, 1], strides = [1, 1]} : vector<8x4xf32> to vector<8x1xf32>
    %6 = vector.extract_strided_slice %0 {offsets = [0, 0], sizes = [1, 512], strides = [1, 1]} : vector<4x512xf32> to vector<1x512xf32>
    %7 = vector.broadcast %5 : vector<8x1xf32> to vector<8x512xf32>
    %8 = vector.broadcast %6 : vector<1x512xf32> to vector<8x512xf32>
    %9 = arith.mulf %7, %8 : vector<8x512xf32>
    %10 = vector.extract_strided_slice %2 {offsets = [0, 1], sizes = [8, 1], strides = [1, 1]} : vector<8x4xf32> to vector<8x1xf32>
    %11 = vector.extract_strided_slice %0 {offsets = [1, 0], sizes = [1, 512], strides = [1, 1]} : vector<4x512xf32> to vector<1x512xf32>
    %12 = vector.broadcast %10 : vector<8x1xf32> to vector<8x512xf32>
    %13 = vector.broadcast %11 : vector<1x512xf32> to vector<8x512xf32>
    %14 = arith.mulf %12, %13 : vector<8x512xf32>
    %15 = arith.addf %9, %14 : vector<8x512xf32>
    %16 = vector.extract_strided_slice %2 {offsets = [0, 2], sizes = [8, 1], strides = [1, 1]} : vector<8x4xf32> to vector<8x1xf32>
    %17 = vector.extract_strided_slice %0 {offsets = [2, 0], sizes = [1, 512], strides = [1, 1]} : vector<4x512xf32> to vector<1x512xf32>
    %18 = vector.broadcast %16 : vector<8x1xf32> to vector<8x512xf32>
    %19 = vector.broadcast %17 : vector<1x512xf32> to vector<8x512xf32>
    %20 = arith.mulf %18, %19 : vector<8x512xf32>
    %21 = arith.addf %15, %20 : vector<8x512xf32>
    %22 = vector.extract_strided_slice %2 {offsets = [0, 3], sizes = [8, 1], strides = [1, 1]} : vector<8x4xf32> to vector<8x1xf32>
    %23 = vector.extract_strided_slice %0 {offsets = [3, 0], sizes = [1, 512], strides = [1, 1]} : vector<4x512xf32> to vector<1x512xf32>
    %24 = vector.broadcast %22 : vector<8x1xf32> to vector<8x512xf32>
    %25 = vector.broadcast %23 : vector<1x512xf32> to vector<8x512xf32>
    %26 = arith.mulf %24, %25 : vector<8x512xf32>
    %27 = arith.addf %21, %26 : vector<8x512xf32>
    %cst = arith.constant dense<0.000000e+00> : vector<8xf32>
    %28 = vector.multi_reduction <add>, %27, %cst [1] : vector<8x512xf32> to vector<8xf32>
    %29 = vector.shape_cast %28 : vector<8xf32> to vector<8x1xf32>
    %30 = arith.mulf %27, %27 : vector<8x512xf32>
    %cst_3 = arith.constant dense<0.000000e+00> : vector<8xf32>
    %31 = vector.multi_reduction <add>, %30, %cst_3 [1] : vector<8x512xf32> to vector<8xf32>
    %32 = vector.shape_cast %31 : vector<8xf32> to vector<8x1xf32>
    %cst_4 = arith.constant 0.00154320989 : f32
    %33 = vector.broadcast %cst_4 : f32 to vector<8x1xf32>
    %34 = arith.mulf %29, %33 : vector<8x1xf32>
    %cst_5 = arith.constant 0.00154320989 : f32
    %35 = vector.broadcast %cst_5 : f32 to vector<8x1xf32>
    %36 = arith.mulf %32, %35 : vector<8x1xf32>
    %37 = arith.mulf %34, %34 : vector<8x1xf32>
    %38 = arith.subf %36, %37 : vector<8x1xf32>
    %cst_6 = arith.constant 0.000000e+00 : f32
    %39 = vector.broadcast %cst_6 : f32 to vector<8x1xf32>
    %40 = arith.maximumf %38, %39 : vector<8x1xf32>
    %cst_7 = arith.constant 9.99999974E-6 : f32
    %41 = vector.broadcast %cst_7 : f32 to vector<8x1xf32>
    %42 = arith.addf %40, %41 : vector<8x1xf32>
    %43 = math.rsqrt %42 : vector<8x1xf32>
    %44 = arith.mulf %3, %43 : vector<8x1xf32>
    %45 = arith.mulf %34, %44 : vector<8x1xf32>
    %46 = arith.subf %4, %45 : vector<8x1xf32>
    %47 = vector.broadcast %44 : vector<8x1xf32> to vector<8x512xf32>
    %48 = arith.mulf %27, %47 : vector<8x512xf32>
    %49 = vector.broadcast %46 : vector<8x1xf32> to vector<8x512xf32>
    %50 = arith.addf %48, %49 : vector<8x512xf32>
    %cst_8 = arith.constant 0.000000e+00 : f32
    %51 = vector.broadcast %cst_8 : f32 to vector<8x512xf32>
    %52 = arith.maximumf %50, %51 : vector<8x512xf32>
    %c0_9 = arith.constant 0 : index
    %c0_10 = arith.constant 0 : index
    %53 = vector.load %arg3[%c0_9, %c0_10] : memref<8x512xf32, #tpu.memory_space<vmem>>, vector<8x512xf32>
    tpu.vector_store %arg3[%c0_9, %c0_10], %52 {strides = array<i32>} : memref<8x512xf32, #tpu.memory_space<vmem>>, vector<8x512xf32>,
    %cst_11 = arith.constant 0.000000e+00 : f32
    %54 = vector.broadcast %cst_11 : f32 to vector<8x1xf32>
    %55 = arith.maximumf %46, %54 : vector<8x1xf32>
    %c0_12 = arith.constant 0 : index
    %c0_13 = arith.constant 0 : index
    %56 = vector.load %arg4[%c0_12, %c0_13] : memref<8x1xf32, #tpu.memory_space<vmem>>, vector<8x1xf32>
    tpu.vector_store %arg4[%c0_12, %c0_13], %55 {strides = array<i32>} : memref<8x1xf32, #tpu.memory_space<vmem>>, vector<8x1xf32>,
    return
  }
  func.func @transform_0(%arg0: i32) -> (i32, i32) {
    %c0_i32 = arith.constant 0 : i32
    %c0_i32_0 = arith.constant 0 : i32
    %c0_i32_1 = arith.constant 0 : i32
    return %c0_i32, %c0_i32_0 : i32, i32
  }
  func.func @transform_1(%arg0: i32) -> (i32, i32) {
    %c0_i32 = arith.constant 0 : i32
    %c0_i32_0 = arith.constant 0 : i32
    %c0_i32_1 = arith.constant 0 : i32
    return %c0_i32, %c0_i32_0 : i32, i32
  }
  func.func @transform_2(%arg0: i32) -> (i32, i32) {
    %c0_i32 = arith.constant 0 : i32
    %c0_i32_0 = arith.constant 0 : i32
    %c0_i32_1 = arith.constant 0 : i32
    return %c0_i32, %c0_i32_0 : i32, i32
  }
  func.func @transform_3(%arg0: i32) -> (i32, i32) {
    %c0_i32 = arith.constant 0 : i32
    %c0_i32_0 = arith.constant 0 : i32
    %c0_i32_1 = arith.constant 0 : i32
    return %c0_i32, %c0_i32_0 : i32, i32
  }
}

</mosaic_0001>

<llo_original>
// kernel: tpu_custom_call.1
$region0: #{tpu_custom_call.1}
  #allocation0 [shape = 'u32[]', space=smem, size = 0x4, offset = 0x4, fixed_abs, tag = 'smem constant byte address 0x4 - core index']
  #allocation1 [shape = 'u32[144,128]{1,0:T(1,128)}', space=vmem, size = 0x12000, scoped, tag = 'internal scratch']
  %s0 = inlined_call_operand.hbm [shape: f32[4,512], index: 0, kind: input, shape index: {}]
  %s1 = inlined_call_operand.hbm [shape: f32[8,7], index: 1, kind: input, shape index: {}]
  %s2 = inlined_call_operand.hbm [shape: f32[8,512], index: 2, kind: output, shape index: {0}]
  %s3 = inlined_call_operand.vmem [shape: f32[8,1], index: 3, kind: output, shape index: {1}]
  %4 = xla_tuple %s2, %s3
  %s5 = sld [smem:[#allocation0]]
  $region34: #{tpu_custom_call.1} parent=0
    _
  %s7 = ssub.s32 1, %s5
  %s8 = scalar_select 0, %s7, %s5
  $region1: #{tpu_custom_call.1} parent=0
    #allocation2 [shape = 'u8[8192]{0}', space=vmem, size = 0x2000, scoped, tag = 'input window, operand 0, single buffered']
    #allocation3 [shape = 's32[1]{0}', space=sflag, size = 0x4, scoped, tag = 'scoped memory for tpu_custom_call.1']
    #allocation4 [shape = 's32[1]{0}', space=sflag, size = 0x4, scoped, tag = 'scoped memory for tpu_custom_call.1']
    #allocation5 [shape = 'u8[4096]{0}', space=vmem, size = 0x1000, scoped, tag = 'input window, operand 1, single buffered']
    #allocation6 [shape = 's32[1]{0}', space=sflag, size = 0x4, scoped, tag = 'scoped memory for tpu_custom_call.1']
    #allocation7 [shape = 'u8[16384]{0}', space=vmem, size = 0x4000, scoped, tag = 'output window, operand 0, single buffered']
    %9 = vsyncpa [#allocation3], 0
    %10 = vsyncpa [#allocation6], 0
    %11 = vsyncpa [#allocation4], 0
    // Predicated region
    $region2: #{tpu_custom_call.1} parent=1 // pred_check
      _
    $region3: #{tpu_custom_call.1} parent=1 // pred_check_branch
      %13 = sbr.rel (0) target = $region5
    $region4: #{tpu_custom_call.1} parent=1 // pred_region
      %s15 = ssub.s32 256, 256
      %16 = vsyncadd [#allocation3], %s15
      %s18 = sshll.u32 [#allocation2], 4
      %s19 = int_to_ptr.vmem [resolvable:$true] %s18
      %21 = dma.hbm_to_vmem [thread:$0]  %s0, 256, %s19, [#allocation3]
    $region5: #{tpu_custom_call.1} parent=1 // pred_fallthru
      _
    // Predicated region
    $region6: #{tpu_custom_call.1} parent=1 // pred_check
      _
    $region7: #{tpu_custom_call.1} parent=1 // pred_check_branch
      %23 = sbr.rel (0) target = $region9
    $region8: #{tpu_custom_call.1} parent=1 // pred_region
      %s25 = ssub.s32 128, 128
      %26 = vsyncadd [#allocation6], %s25
      %s28 = sshll.u32 [#allocation5], 4
      %s29 = int_to_ptr.vmem [resolvable:$true] %s28
      %31 = dma.hbm_to_vmem [thread:$0]  %s1, 128, %s29, [#allocation6]
    $region9: #{tpu_custom_call.1} parent=1 // pred_fallthru
      _
    // Predicated region
    $region10: #{tpu_custom_call.1} parent=1 // pred_check
      _
    $region11: #{tpu_custom_call.1} parent=1 // pred_check_branch
      %33 = sbr.rel (0) target = $region13
    $region12: #{tpu_custom_call.1} parent=1 // pred_region
      %34 = dma.done [#allocation3], 256
    $region13: #{tpu_custom_call.1} parent=1 // pred_fallthru
      _
    // Predicated region
    $region14: #{tpu_custom_call.1} parent=1 // pred_check
      _
    $region15: #{tpu_custom_call.1} parent=1 // pred_check_branch
      %36 = sbr.rel (0) target = $region17
    $region16: #{tpu_custom_call.1} parent=1 // pred_region
      %37 = dma.done [#allocation6], 128
    $region17: #{tpu_custom_call.1} parent=1 // pred_fallthru
      _
    %v38 = vld [vmem:[#allocation2] sm:$0xff]
    %v39 = vld [vmem:[#allocation2 + $0x8] sm:$0xff]
    %v40 = vld [vmem:[#allocation5] sm:$0xff]
    %42 = vset.pattern.permute.xlu0 0
    %43 = vperm.xlu0 %42, %v40
    %v44 = vpop.permute.xlu0 %43
    %v48 = vlaneseq
    %v49 = vshrl.u32 %v48, 7
    %v50 = vsub.s32 0, %v49
    %v51 = vrot.slane %v38, %v50
    %v52 = vlaneseq
    %v53 = vshrl.u32 %v52, 7
    %v54 = vsub.s32 4, %v53
    %v55 = vrot.slane %v38, %v54
    %v56 = vlaneseq
    %v57 = vshrl.u32 %v56, 7
    %v58 = vsub.s32 0, %v57
    %v59 = vrot.slane %v39, %v58
    %v60 = vlaneseq
    %v61 = vshrl.u32 %v60, 7
    %v62 = vsub.s32 4, %v61
    %v63 = vrot.slane %v39, %v62
    %v68 = vlaneseq
    %v69 = vshrl.u32 %v68, 7
    %v70 = vsub.s32 0, %v69
    %v71 = vrot.slane %v51, %v70
    %v72 = vlaneseq
    %v73 = vshrl.u32 %v72, 7
    %v74 = vsub.s32 0, %v73
    %v75 = vrot.slane %v55, %v74
    %v76 = vlaneseq
    %v77 = vshrl.u32 %v76, 7
    %v78 = vsub.s32 0, %v77
    %v79 = vrot.slane %v59, %v78
    %v80 = vlaneseq
    %v81 = vshrl.u32 %v80, 7
    %v82 = vsub.s32 0, %v81
    %v83 = vrot.slane %v63, %v82
    %v84 = vmul.f32 %v44, %v71
    %v85 = vmul.f32 %v44, %v75
    %v86 = vmul.f32 %v44, %v79
    %v87 = vmul.f32 %v44, %v83
    %88 = vset.pattern.permute.xlu0 1
    %89 = vperm.xlu0 %88, %v40
    %v90 = vpop.permute.xlu0 %89
    %v92 = vlaneseq
    %v93 = vshrl.u32 %v92, 7
    %v94 = vsub.s32 1, %v93
    %v95 = vrot.slane %v38, %v94
    %v96 = vlaneseq
    %v97 = vshrl.u32 %v96, 7
    %v98 = vsub.s32 5, %v97
    %v99 = vrot.slane %v38, %v98
    %v100 = vlaneseq
    %v101 = vshrl.u32 %v100, 7
    %v102 = vsub.s32 1, %v101
    %v103 = vrot.slane %v39, %v102
    %v104 = vlaneseq
    %v105 = vshrl.u32 %v104, 7
    %v106 = vsub.s32 5, %v105
    %v107 = vrot.slane %v39, %v106
    %v112 = vlaneseq
    %v113 = vshrl.u32 %v112, 7
    %v114 = vsub.s32 1, %v113
    %v115 = vrot.slane %v95, %v114
    %v116 = vlaneseq
    %v117 = vshrl.u32 %v116, 7
    %v118 = vsub.s32 1, %v117
    %v119 = vrot.slane %v99, %v118
    %v120 = vlaneseq
    %v121 = vshrl.u32 %v120, 7
    %v122 = vsub.s32 1, %v121
    %v123 = vrot.slane %v103, %v122
    %v124 = vlaneseq
    %v125 = vshrl.u32 %v124, 7
    %v126 = vsub.s32 1, %v125
    %v127 = vrot.slane %v107, %v126
    %v128 = vmul.f32 %v90, %v115
    %v129 = vmul.f32 %v90, %v119
    %v130 = vmul.f32 %v90, %v123
    %v131 = vmul.f32 %v90, %v127
    %v132 = vadd.f32 %v84, %v128
    %v133 = vadd.f32 %v85, %v129
    %v134 = vadd.f32 %v86, %v130
    %v135 = vadd.f32 %v87, %v131
    %136 = vset.pattern.permute.xlu0 2
    %137 = vperm.xlu0 %136, %v40
    %v138 = vpop.permute.xlu0 %137
    %v140 = vlaneseq
    %v141 = vshrl.u32 %v140, 7
    %v142 = vsub.s32 2, %v141
    %v143 = vrot.slane %v38, %v142
    %v144 = vlaneseq
    %v145 = vshrl.u32 %v144, 7
    %v146 = vsub.s32 6, %v145
    %v147 = vrot.slane %v38, %v146
    %v148 = vlaneseq
    %v149 = vshrl.u32 %v148, 7
    %v150 = vsub.s32 2, %v149
    %v151 = vrot.slane %v39, %v150
    %v152 = vlaneseq
    %v153 = vshrl.u32 %v152, 7
    %v154 = vsub.s32 6, %v153
    %v155 = vrot.slane %v39, %v154
    %v160 = vlaneseq
    %v161 = vshrl.u32 %v160, 7
    %v162 = vsub.s32 2, %v161
    %v163 = vrot.slane %v143, %v162
    %v164 = vlaneseq
    %v165 = vshrl.u32 %v164, 7
    %v166 = vsub.s32 2, %v165
    %v167 = vrot.slane %v147, %v166
    %v168 = vlaneseq
    %v169 = vshrl.u32 %v168, 7
    %v170 = vsub.s32 2, %v169
    %v171 = vrot.slane %v151, %v170
    %v172 = vlaneseq
    %v173 = vshrl.u32 %v172, 7
    %v174 = vsub.s32 2, %v173
    %v175 = vrot.slane %v155, %v174
    %v176 = vmul.f32 %v138, %v163
    %v177 = vmul.f32 %v138, %v167
    %v178 = vmul.f32 %v138, %v171
    %v179 = vmul.f32 %v138, %v175
    %v180 = vadd.f32 %v132, %v176
    %v181 = vadd.f32 %v133, %v177
    %v182 = vadd.f32 %v134, %v178
    %v183 = vadd.f32 %v135, %v179
    %184 = vset.pattern.permute.xlu0 3
    %185 = vperm.xlu0 %184, %v40
    %v186 = vpop.permute.xlu0 %185
    %v188 = vlaneseq
    %v189 = vshrl.u32 %v188, 7
    %v190 = vsub.s32 3, %v189
    %v191 = vrot.slane %v38, %v190
    %v192 = vlaneseq
    %v193 = vshrl.u32 %v192, 7
    %v194 = vsub.s32 7, %v193
    %v195 = vrot.slane %v38, %v194
    %v196 = vlaneseq
    %v197 = vshrl.u32 %v196, 7
    %v198 = vsub.s32 3, %v197
    %v199 = vrot.slane %v39, %v198
    %v200 = vlaneseq
    %v201 = vshrl.u32 %v200, 7
    %v202 = vsub.s32 7, %v201
    %v203 = vrot.slane %v39, %v202
    %v208 = vlaneseq
    %v209 = vshrl.u32 %v208, 7
    %v210 = vsub.s32 3, %v209
    %v211 = vrot.slane %v191, %v210
    %v212 = vlaneseq
    %v213 = vshrl.u32 %v212, 7
    %v214 = vsub.s32 3, %v213
    %v215 = vrot.slane %v195, %v214
    %v216 = vlaneseq
    %v217 = vshrl.u32 %v216, 7
    %v218 = vsub.s32 3, %v217
    %v219 = vrot.slane %v199, %v218
    %v220 = vlaneseq
    %v221 = vshrl.u32 %v220, 7
    %v222 = vsub.s32 3, %v221
    %v223 = vrot.slane %v203, %v222
    %v224 = vmul.f32 %v186, %v211
    %v225 = vmul.f32 %v186, %v215
    %v226 = vmul.f32 %v186, %v219
    %v227 = vmul.f32 %v186, %v223
    %v228 = vadd.f32 %v180, %v224
    %v229 = vadd.f32 %v181, %v225
    %v230 = vadd.f32 %v182, %v226
    %v231 = vadd.f32 %v183, %v227
    %v232 = vadd.f32 %v228, %v229
    %v233 = vadd.f32 %v232, %v230
    %v234 = vadd.f32 %v233, %v231
    %235 = vadd.xlane.f32.xlu0 %v234
    %v236 = vpop.xlane.xlu0 %235
    %v237 = vmul.f32 %v228, %v228
    %v238 = vmul.f32 %v229, %v229
    %v239 = vmul.f32 %v230, %v230
    %v240 = vmul.f32 %v231, %v231
    %v241 = vadd.f32 %v237, %v238
    %v242 = vadd.f32 %v241, %v239
    %v243 = vadd.f32 %v242, %v240
    %244 = vadd.xlane.f32.xlu0 %v243
    %v245 = vpop.xlane.xlu0 %244
    %v246 = vmul.f32 %v236, 0.0015432099
    %v247 = vmul.f32 %v245, 0.0015432099
    %v248 = vmul.f32 %v246, %v246
    %v249 = vsub.f32 %v247, %v248
    %v250 = vmax.f32 %v249, 0.0
    %v251 = vadd.f32 %v250, 1e-05
    %v252 = vrsqrt.pop %v251
    %v253 = vmul.f32 %v40, %v252
    %v254 = vmul.f32 %v246, %v253
    %256 = vrot.lane.b32.xlu0 %v254, 1
    %v257 = vpop.permute.xlu0 %256
    %v259 = vsub.f32 %v40, %v257
    %261 = vset.pattern.permute.xlu0 5
    %262 = vperm.xlu0 %261, %v253
    %v263 = vpop.permute.xlu0 %262
    %v265 = vmul.f32 %v228, %v263
    %v266 = vmul.f32 %v229, %v263
    %v267 = vmul.f32 %v230, %v263
    %v268 = vmul.f32 %v231, %v263
    %270 = vset.pattern.permute.xlu0 6
    %271 = vperm.xlu0 %270, %v259
    %v272 = vpop.permute.xlu0 %271
    %v274 = vadd.f32 %v265, %v272
    %v275 = vadd.f32 %v266, %v272
    %v276 = vadd.f32 %v267, %v272
    %v277 = vadd.f32 %v268, %v272
    %v278 = vmax.f32 %v274, 0.0
    %v279 = vmax.f32 %v275, 0.0
    %v280 = vmax.f32 %v276, 0.0
    %v281 = vmax.f32 %v277, 0.0
    %282 = vst [vmem:[#allocation7] sm:$0xff] %v278
    %283 = vst [vmem:[#allocation7 + $0x8] sm:$0xff] %v279
    %284 = vst [vmem:[#allocation7 + $0x10] sm:$0xff] %v280
    %285 = vst [vmem:[#allocation7 + $0x18] sm:$0xff] %v281
    %v286 = vmax.f32 %v259, 0.0
    %288 = vrot.lane.b32.xlu0 %v286, 122
    %v289 = vpop.permute.xlu0 %288
    %vm291 = vcmask 7168
    %292 = vst.msk [vmem:[%s3] sm:$0xff] %vm291, %v289
    // Predicated region
    $region18: #{tpu_custom_call.1} parent=1 // pred_check
      _
    $region19: #{tpu_custom_call.1} parent=1 // pred_check_branch
      %294 = sbr.rel (0) target = $region21
    $region20: #{tpu_custom_call.1} parent=1 // pred_region
      %s296 = ssub.s32 512, 512
      %297 = vsyncadd [#allocation4], %s296
      %s299 = sshll.u32 [#allocation7], 4
      %s300 = int_to_ptr.vmem [resolvable:$true] %s299
      %302 = dma.vmem_to_hbm [thread:$0]  %s300, 512, %s2, [#allocation4]
    $region21: #{tpu_custom_call.1} parent=1 // pred_fallthru
      _
    // Predicated region
    $region22: #{tpu_custom_call.1} parent=1 // pred_check
      _
    $region23: #{tpu_custom_call.1} parent=1 // pred_check_branch
      %304 = sbr.rel (0) target = $region25
    $region24: #{tpu_custom_call.1} parent=1 // pred_region
      _
    $region25: #{tpu_custom_call.1} parent=1 // pred_fallthru
      _
    // Predicated region
    $region26: #{tpu_custom_call.1} parent=1 // pred_check
      _
    $region27: #{tpu_custom_call.1} parent=1 // pred_check_branch
      %306 = sbr.rel (0) target = $region29
    $region28: #{tpu_custom_call.1} parent=1 // pred_region
      %307 = dma.done [#allocation4], 512
    $region29: #{tpu_custom_call.1} parent=1 // pred_fallthru
      _
    // Predicated region
    $region30: #{tpu_custom_call.1} parent=1 // pred_check
      _
    $region31: #{tpu_custom_call.1} parent=1 // pred_check_branch
      %309 = sbr.rel (0) target = $region33
    $region32: #{tpu_custom_call.1} parent=1 // pred_region
      _
    $region33: #{tpu_custom_call.1} parent=1 // pred_fallthru
      _
    %310 = vsyncpa [#allocation3], 1
    %311 = vsyncpa [#allocation6], 1
    %312 = vsyncpa [#allocation4], 1

</llo_original>
